<compile_context>
chip_gen: v5e
topology: v5e:2x2
jax: 0.10.0
libtpu: 0.0.40
codegen_flags: <defaults>
</compile_context>

<pallas_src>
import functools

import jax
import jax.numpy as jnp
from jax import lax
from jax.experimental import pallas as pl
from jax.experimental.pallas import tpu as pltpu


def _pick_hw_chunk(hw):
    """Largest multiple-of-128 chunk (<=2048 lanes) dividing hw; else whole hw."""
    for c in (2048, 1024, 512, 256, 128):
        if hw >= c and hw % c == 0:
            return c
    return hw


def _pick_batch_tile(n, row_bytes, budget_bytes, min_block_bytes=4 << 20):
    """Largest divisor of n whose double-buffered in+out footprint fits budget."""
    max_nt = max(1, budget_bytes // (4 * row_bytes))  # 2 bufs x (in + out)
    divisors = [d for d in range(1, n + 1) if n % d == 0 and d <= max_nt]
    nt = max(divisors)
    # Prefer >=2 grid steps (megacore / v7x dual-TC) only if blocks stay large.
    if nt == n and n > 1:
        smaller = [d for d in divisors if d < n]
        if smaller and max(smaller) * row_bytes >= min_block_bytes:
            nt = max(smaller)
    return nt


def se_block_kernel(x_ref, w1_ref, b1_ref, w2_ref, b2_ref, o_ref, *,
                    hw_chunk, n_chunks):
    # x_ref / o_ref: (Nt, C, HW) lane-dense blocks.
    nt, c, hw = x_ref.shape
    inv_hw = 1.0 / float(hw)

    # ---- Phase 1: squeeze — global average pool, streamed over HW chunks ----
    def pool_body(i, acc):
        start = pl.multiple_of(i * hw_chunk, hw_chunk)
        chunk = x_ref[:, :, pl.ds(start, hw_chunk)].astype(jnp.float32)
        return acc + jnp.sum(chunk, axis=-1)          # lane reduction -> (Nt, C)

    s = lax.fori_loop(0, n_chunks, pool_body,
                      jnp.zeros((nt, c), jnp.float32)) * inv_hw

    # ---- Phase 2: excite — two tiny 1x1-conv matmuls (f32 accumulation) ----
    # (Nt, C) @ (C, Cr) + (1, Cr)  -> ReLU
    h = jnp.dot(s, w1_ref[...], preferred_element_type=jnp.float32) + b1_ref[...]
    h = jnp.maximum(h, 0.0)
    # (Nt, Cr) @ (Cr, C) + (1, C) -> Sigmoid
    g = jnp.dot(h, w2_ref[...], preferred_element_type=jnp.float32) + b2_ref[...]
    g = jax.nn.sigmoid(g)
    g = g[:, :, None].astype(x_ref.dtype)             # (Nt, C, 1), lane-broadcast

    # ---- Phase 3: scale — re-read x_ref per chunk, write straight to o_ref ----
    def scale_body(i, carry):
        start = pl.multiple_of(i * hw_chunk, hw_chunk)
        idx = (slice(None), slice(None), pl.ds(start, hw_chunk))
        o_ref[idx] = (x_ref[idx] * g).astype(o_ref.dtype)
        return carry

    lax.fori_loop(0, n_chunks, scale_body, 0)


def se_block(x, w1, b1, w2, b2, *, vmem_block_budget_bytes=36 << 20):
    """x: (N, C, H, W) f32; w1: (C, Cr); b1: (1, Cr); w2: (Cr, C); b2: (1, C)."""
    N, C, H, W = x.shape
    Cr = w1.shape[1]
    HW = H * W

    # Lane-dense layout: do the reshape outside the kernel (free layout plumbing).
    x3 = x.reshape(N, C, HW)

    row_bytes = C * HW * x.dtype.itemsize
    Nt = _pick_batch_tile(N, row_bytes, vmem_block_budget_bytes)
    hw_chunk = _pick_hw_chunk(HW)
    n_chunks = HW // hw_chunk

    kernel = functools.partial(se_block_kernel,
                               hw_chunk=hw_chunk, n_chunks=n_chunks)

    # Bandwidth-heavy, compute-light hint for XLA's scheduler.
    cost = pl.CostEstimate(
        flops=2 * N * C * HW + 4 * N * C * Cr,
        transcendentals=N * C,
        bytes_accessed=2 * N * C * HW * x.dtype.itemsize
        + (C * Cr + Cr + Cr * C + C) * 4,
    )

    out3 = pl.pallas_call(
        kernel,
        out_shape=jax.ShapeDtypeStruct((N, C, HW), x.dtype),
        grid_spec=pltpu.PrefetchScalarGridSpec(
            num_scalar_prefetch=0,
            grid=(N // Nt,),
            in_specs=[
                pl.BlockSpec((Nt, C, HW), lambda n: (n, 0, 0)),   # x (lane-dense)
                pl.BlockSpec((C, Cr), lambda n: (0, 0)),          # w1
                pl.BlockSpec((1, Cr), lambda n: (0, 0)),          # b1
                pl.BlockSpec((Cr, C), lambda n: (0, 0)),          # w2
                pl.BlockSpec((1, C), lambda n: (0, 0)),           # b2
            ],
            out_specs=pl.BlockSpec((Nt, C, HW), lambda n: (n, 0, 0)),
        ),
        compiler_params=pltpu.CompilerParams(
            dimension_semantics=("parallel",),
            vmem_limit_bytes=48 * 1024 * 1024,   # above 32 MiB scoped default,
                                                 # safely under v7x's 64 MiB physical
        ),
        cost_estimate=cost,
    )(x3, w1, b1, w2, b2)

    return out3.reshape(N, C, H, W)


def se_block_ref(x, w1, b1, w2, b2):
    """Pure-JAX reference with identical semantics to the PyTorch module."""
    s = jnp.mean(x, axis=(2, 3))                      # (N, C)  AdaptiveAvgPool2d(1)
    h = jnp.maximum(s @ w1 + b1, 0.0)                 # (N, Cr) Conv2d(C,Cr,1)+ReLU
    g = jax.nn.sigmoid(h @ w2 + b2)                   # (N, C)  Conv2d(Cr,C,1)+Sigmoid
    return x * g[:, :, None, None]


if __name__ == "__main__":
    # Shapes: SEBlock(c=32, r=16) -> hidden = c // r = 2
    N, C, H, W = 2, 32, 16, 16
    r = 16
    Cr = C // r

    key = jax.random.PRNGKey(0)
    kx, k1, k2, k3, k4 = jax.random.split(key, 5)

    x = jax.random.normal(kx, (N, C, H, W), dtype=jnp.float32)

    # PyTorch Conv2d(c, c//r, 1) weight shape is (Cr, C, 1, 1); we store the
    # squeezed transposed matrices so the kernel does plain row-vector matmuls.
    w1 = 0.1 * jax.random.normal(k1, (C, Cr), dtype=jnp.float32)   # conv1.weight[:, :, 0, 0].T
    b1 = 0.1 * jax.random.normal(k2, (1, Cr), dtype=jnp.float32)   # conv1.bias
    w2 = 0.1 * jax.random.normal(k3, (Cr, C), dtype=jnp.float32)   # conv2.weight[:, :, 0, 0].T
    b2 = 0.1 * jax.random.normal(k4, (1, C), dtype=jnp.float32)    # conv2.bias

    out = se_block(x, w1, b1, w2, b2)
    out = jax.block_until_ready(out)

    ref = se_block_ref(x, w1, b1, w2, b2)
    assert out.shape == (N, C, H, W)
    assert jnp.allclose(out, ref, atol=1e-5, rtol=1e-5)

    print("KERNEL_OK")
</pallas_src>

<mosaic_0001>
module attributes {stable_mosaic.version = 11 : i64} {
  func.func @se_block_kernel(%arg0: i32, %arg1: memref<2x32x256xf32, #tpu.memory_space<vmem>>, %arg2: memref<32x2xf32, #tpu.memory_space<vmem>>, %arg3: memref<1x2xf32, #tpu.memory_space<vmem>>, %arg4: memref<2x32xf32, #tpu.memory_space<vmem>>, %arg5: memref<1x32xf32, #tpu.memory_space<vmem>>, %arg6: memref<2x32x256xf32, #tpu.memory_space<vmem>>) attributes {dimension_semantics = [#tpu.dimension_semantics<parallel>], iteration_bounds = array<i64: 1>, scalar_prefetch = 0 : i64, scratch_operands = 0 : i64, tpu.core_type = #tpu.core_type<tc>, window_params = [{transform_indices = @transform_0, window_bounds = array<i64: 2, 32, 256>}, {pipeline_mode = #tpu.pipeline_mode<synchronous>, transform_indices = @transform_1, window_bounds = array<i64: 32, 2>}, {pipeline_mode = #tpu.pipeline_mode<synchronous>, transform_indices = @transform_2, window_bounds = array<i64: 1, 2>}, {pipeline_mode = #tpu.pipeline_mode<synchronous>, transform_indices = @transform_3, window_bounds = array<i64: 2, 32>}, {pipeline_mode = #tpu.pipeline_mode<synchronous>, transform_indices = @transform_4, window_bounds = array<i64: 1, 32>}, {transform_indices = @transform_5, window_bounds = array<i64: 2, 32, 256>}]} {
    %cst = arith.constant 0.000000e+00 : f32
    %0 = vector.broadcast %cst : f32 to vector<2x32xf32>
    %c0_i32 = arith.constant 0 : i32
    %c256_i32 = arith.constant 256 : i32
    %1 = arith.muli %c0_i32, %c256_i32 : i32
    %2 = tpu.assume_multiple %1, 256 : i32
    %c0 = arith.constant 0 : index
    %c0_0 = arith.constant 0 : index
    %3 = arith.index_cast %2 : i32 to index
    %4 = vector.load %arg1[%c0, %c0_0, %3] : memref<2x32x256xf32, #tpu.memory_space<vmem>>, vector<2x32x256xf32>
    %cst_1 = arith.constant dense<0.000000e+00> : vector<2x32xf32>
    %5 = vector.multi_reduction <add>, %4, %cst_1 [2] : vector<2x32x256xf32> to vector<2x32xf32>
    %6 = arith.addf %0, %5 : vector<2x32xf32>
    %c1_i32 = arith.constant 1 : i32
    %cst_2 = arith.constant 3.906250e-03 : f32
    %7 = vector.broadcast %cst_2 : f32 to vector<2x32xf32>
    %8 = arith.mulf %6, %7 : vector<2x32xf32>
    %c0_3 = arith.constant 0 : index
    %c0_4 = arith.constant 0 : index
    %9 = vector.load %arg2[%c0_3, %c0_4] : memref<32x2xf32, #tpu.memory_space<vmem>>, vector<32x2xf32>
    %cst_5 = arith.constant dense<0.000000e+00> : vector<2x2xf32>
    %10 = tpu.matmul %8, %9, %cst_5 {dimension_numbers = #tpu.dot_dimension_numbers<[1], [0], [0], [1], [0, 0, 1, 1], [], []>} : vector<2x32xf32>, vector<32x2xf32>, vector<2x2xf32> -> vector<2x2xf32>
    %c0_6 = arith.constant 0 : index
    %c0_7 = arith.constant 0 : index
    %11 = vector.load %arg3[%c0_6, %c0_7] : memref<1x2xf32, #tpu.memory_space<vmem>>, vector<1x2xf32>
    %12 = vector.broadcast %11 : vector<1x2xf32> to vector<2x2xf32>
    %13 = arith.addf %10, %12 : vector<2x2xf32>
    %cst_8 = arith.constant 0.000000e+00 : f32
    %14 = vector.broadcast %cst_8 : f32 to vector<2x2xf32>
    %15 = arith.maximumf %13, %14 : vector<2x2xf32>
    %c0_9 = arith.constant 0 : index
    %c0_10 = arith.constant 0 : index
    %16 = vector.load %arg4[%c0_9, %c0_10] : memref<2x32xf32, #tpu.memory_space<vmem>>, vector<2x32xf32>
    %cst_11 = arith.constant dense<0.000000e+00> : vector<2x32xf32>
    %17 = tpu.matmul %15, %16, %cst_11 {dimension_numbers = #tpu.dot_dimension_numbers<[1], [0], [0], [1], [0, 0, 1, 1], [], []>} : vector<2x2xf32>, vector<2x32xf32>, vector<2x32xf32> -> vector<2x32xf32>
    %c0_12 = arith.constant 0 : index
    %c0_13 = arith.constant 0 : index
    %18 = vector.load %arg5[%c0_12, %c0_13] : memref<1x32xf32, #tpu.memory_space<vmem>>, vector<1x32xf32>
    %19 = vector.broadcast %18 : vector<1x32xf32> to vector<2x32xf32>
    %20 = arith.addf %17, %19 : vector<2x32xf32>
    %21 = arith.negf %20 : vector<2x32xf32>
    %22 = math.exp %21 : vector<2x32xf32>
    %cst_14 = arith.constant 1.000000e+00 : f32
    %23 = vector.broadcast %cst_14 : f32 to vector<2x32xf32>
    %24 = arith.addf %23, %22 : vector<2x32xf32>
    %25 = arith.divf %23, %24 : vector<2x32xf32>
    %26 = vector.shape_cast %25 : vector<2x32xf32> to vector<2x32x1xf32>
    %c0_i32_15 = arith.constant 0 : i32
    %c256_i32_16 = arith.constant 256 : i32
    %27 = arith.muli %c0_i32_15, %c256_i32_16 : i32
    %28 = tpu.assume_multiple %27, 256 : i32
    %c0_17 = arith.constant 0 : index
    %c0_18 = arith.constant 0 : index
    %29 = arith.index_cast %28 : i32 to index
    %30 = vector.load %arg1[%c0_17, %c0_18, %29] : memref<2x32x256xf32, #tpu.memory_space<vmem>>, vector<2x32x256xf32>
    %31 = vector.broadcast %26 : vector<2x32x1xf32> to vector<2x32x256xf32>
    %32 = arith.mulf %30, %31 : vector<2x32x256xf32>
    %c0_19 = arith.constant 0 : index
    %c0_20 = arith.constant 0 : index
    %33 = arith.index_cast %28 : i32 to index
    %34 = vector.load %arg6[%c0_19, %c0_20, %33] : memref<2x32x256xf32, #tpu.memory_space<vmem>>, vector<2x32x256xf32>
    tpu.vector_store %arg6[%c0_19, %c0_20, %33], %32 {strides = array<i32>} : memref<2x32x256xf32, #tpu.memory_space<vmem>>, vector<2x32x256xf32>,
    %c1_i32_21 = arith.constant 1 : i32
    return
  }
  func.func @transform_0(%arg0: i32) -> (i32, i32, i32) {
    %c0_i32 = arith.constant 0 : i32
    %c0_i32_0 = arith.constant 0 : i32
    %c0_i32_1 = arith.constant 0 : i32
    return %arg0, %c0_i32, %c0_i32_0 : i32, i32, i32
  }
  func.func @transform_1(%arg0: i32) -> (i32, i32) {
    %c0_i32 = arith.constant 0 : i32
    %c0_i32_0 = arith.constant 0 : i32
    %c0_i32_1 = arith.constant 0 : i32
    return %c0_i32, %c0_i32_0 : i32, i32
  }
  func.func @transform_2(%arg0: i32) -> (i32, i32) {
    %c0_i32 = arith.constant 0 : i32
    %c0_i32_0 = arith.constant 0 : i32
    %c0_i32_1 = arith.constant 0 : i32
    return %c0_i32, %c0_i32_0 : i32, i32
  }
  func.func @transform_3(%arg0: i32) -> (i32, i32) {
    %c0_i32 = arith.constant 0 : i32
    %c0_i32_0 = arith.constant 0 : i32
    %c0_i32_1 = arith.constant 0 : i32
    return %c0_i32, %c0_i32_0 : i32, i32
  }
  func.func @transform_4(%arg0: i32) -> (i32, i32) {
    %c0_i32 = arith.constant 0 : i32
    %c0_i32_0 = arith.constant 0 : i32
    %c0_i32_1 = arith.constant 0 : i32
    return %c0_i32, %c0_i32_0 : i32, i32
  }
  func.func @transform_5(%arg0: i32) -> (i32, i32, i32) {
    %c0_i32 = arith.constant 0 : i32
    %c0_i32_0 = arith.constant 0 : i32
    %c0_i32_1 = arith.constant 0 : i32
    return %arg0, %c0_i32, %c0_i32_0 : i32, i32, i32
  }
}

</mosaic_0001>

<llo_original>
// kernel: tpu_custom_call.1
$region0: #{tpu_custom_call.1}
  #allocation0 [shape = 'u32[]', space=smem, size = 0x4, offset = 0x4, fixed_abs, tag = 'smem constant byte address 0x4 - core index']
  #allocation1 [shape = 'u32[72,128]{1,0:T(1,128)}', space=vmem, size = 0x9000, scoped, tag = 'internal scratch']
  %s0 = inlined_call_operand.hbm [shape: f32[2,32,256], index: 0, kind: input, shape index: {}]
  %s1 = inlined_call_operand.vmem [shape: f32[32,2], index: 1, kind: input, shape index: {}]
  %s2 = inlined_call_operand.vmem [shape: f32[1,2], index: 2, kind: input, shape index: {}]
  %s3 = inlined_call_operand.vmem [shape: f32[2,32], index: 3, kind: input, shape index: {}]
  %s4 = inlined_call_operand.vmem [shape: f32[1,32], index: 4, kind: input, shape index: {}]
  %s5 = inlined_call_operand.hbm [shape: f32[2,32,256], index: 5, kind: output, shape index: {}]
  %s6 = sld [smem:[#allocation0]]
  $region34: #{tpu_custom_call.1} parent=0
    _
  %s8 = ssub.s32 1, %s6
  %s9 = scalar_select 0, %s8, %s6
  $region1: #{tpu_custom_call.1} parent=0
    #allocation2 [shape = 'u8[65536]{0}', space=vmem, size = 0x10000, scoped, tag = 'input window, operand 0, single buffered']
    #allocation3 [shape = 's32[1]{0}', space=sflag, size = 0x4, scoped, tag = 'scoped memory for tpu_custom_call.1']
    #allocation4 [shape = 's32[1]{0}', space=sflag, size = 0x4, scoped, tag = 'scoped memory for tpu_custom_call.1']
    #allocation5 [shape = 'u8[65536]{0}', space=vmem, size = 0x10000, scoped, tag = 'output window, operand 0, single buffered']
    %10 = vsyncpa [#allocation3], 0
    %11 = vsyncpa [#allocation4], 0
    // Predicated region
    $region2: #{tpu_custom_call.1} parent=1 // pred_check
      _
    $region3: #{tpu_custom_call.1} parent=1 // pred_check_branch
      %13 = sbr.rel (0) target = $region5
    $region4: #{tpu_custom_call.1} parent=1 // pred_region
      %15 = vsyncadd [#allocation3], 0
      %s16 = sshll.u32 %s0, 4
      %s17 = int_to_ptr.hbm [resolvable:$true] %s16
      %s18 = sshll.u32 [#allocation2], 4
      %s19 = int_to_ptr.vmem [resolvable:$true] %s18
      %24 = dma.hbm_to_vmem [thread:$0]  %s17, 2048, %s19, [#allocation3], 256, 256, 16
    $region5: #{tpu_custom_call.1} parent=1 // pred_fallthru
      _
    // Predicated region
    $region6: #{tpu_custom_call.1} parent=1 // pred_check
      _
    $region7: #{tpu_custom_call.1} parent=1 // pred_check_branch
      %26 = sbr.rel (0) target = $region9
    $region8: #{tpu_custom_call.1} parent=1 // pred_region
      _
    $region9: #{tpu_custom_call.1} parent=1 // pred_fallthru
      _
    // Predicated region
    $region10: #{tpu_custom_call.1} parent=1 // pred_check
      _
    $region11: #{tpu_custom_call.1} parent=1 // pred_check_branch
      %28 = sbr.rel (0) target = $region13
    $region12: #{tpu_custom_call.1} parent=1 // pred_region
      _
    $region13: #{tpu_custom_call.1} parent=1 // pred_fallthru
      _
    // Predicated region
    $region14: #{tpu_custom_call.1} parent=1 // pred_check
      _
    $region15: #{tpu_custom_call.1} parent=1 // pred_check_branch
      %30 = sbr.rel (0) target = $region17
    $region16: #{tpu_custom_call.1} parent=1 // pred_region
      _
    $region17: #{tpu_custom_call.1} parent=1 // pred_fallthru
      _
    // Predicated region
    $region18: #{tpu_custom_call.1} parent=1 // pred_check
      _
    $region19: #{tpu_custom_call.1} parent=1 // pred_check_branch
      %32 = sbr.rel (0) target = $region21
    $region20: #{tpu_custom_call.1} parent=1 // pred_region
      _
    $region21: #{tpu_custom_call.1} parent=1 // pred_fallthru
      _
    // Predicated region
    $region22: #{tpu_custom_call.1} parent=1 // pred_check
      _
    $region23: #{tpu_custom_call.1} parent=1 // pred_check_branch
      %34 = sbr.rel (0) target = $region25
    $region24: #{tpu_custom_call.1} parent=1 // pred_region
      %36 = dma.done [#allocation3], 2048
    $region25: #{tpu_custom_call.1} parent=1 // pred_fallthru
      _
    %v37 = vld [vmem:[#allocation2] sm:$0xff]
    %v38 = vld [vmem:[#allocation2 + $0x8] sm:$0xff]
    %v39 = vld [vmem:[#allocation2 + $0x10] sm:$0xff]
    %v40 = vld [vmem:[#allocation2 + $0x18] sm:$0xff]
    %v41 = vld [vmem:[#allocation2 + $0x20] sm:$0xff]
    %v42 = vld [vmem:[#allocation2 + $0x28] sm:$0xff]
    %v43 = vld [vmem:[#allocation2 + $0x30] sm:$0xff]
    %v44 = vld [vmem:[#allocation2 + $0x38] sm:$0xff]
    %v45 = vld [vmem:[#allocation2 + $0x40] sm:$0xff]
    %v46 = vld [vmem:[#allocation2 + $0x48] sm:$0xff]
    %v47 = vld [vmem:[#allocation2 + $0x50] sm:$0xff]
    %v48 = vld [vmem:[#allocation2 + $0x58] sm:$0xff]
    %v49 = vld [vmem:[#allocation2 + $0x60] sm:$0xff]
    %v50 = vld [vmem:[#allocation2 + $0x68] sm:$0xff]
    %v51 = vld [vmem:[#allocation2 + $0x70] sm:$0xff]
    %v52 = vld [vmem:[#allocation2 + $0x78] sm:$0xff]
    %v53 = vadd.f32 %v37, %v38
    %54 = vadd.xlane.f32.xlu0 %v53
    %v55 = vpop.xlane.xlu0 %54
    %v56 = vadd.f32 %v39, %v40
    %57 = vadd.xlane.f32.xlu0 %v56
    %v58 = vpop.xlane.xlu0 %57
    %v59 = vadd.f32 %v41, %v42
    %60 = vadd.xlane.f32.xlu0 %v59
    %v61 = vpop.xlane.xlu0 %60
    %v62 = vadd.f32 %v43, %v44
    %63 = vadd.xlane.f32.xlu0 %v62
    %v64 = vpop.xlane.xlu0 %63
    %v65 = vadd.f32 %v45, %v46
    %66 = vadd.xlane.f32.xlu0 %v65
    %v67 = vpop.xlane.xlu0 %66
    %v68 = vadd.f32 %v47, %v48
    %69 = vadd.xlane.f32.xlu0 %v68
    %v70 = vpop.xlane.xlu0 %69
    %v71 = vadd.f32 %v49, %v50
    %72 = vadd.xlane.f32.xlu0 %v71
    %v73 = vpop.xlane.xlu0 %72
    %v74 = vadd.f32 %v51, %v52
    %75 = vadd.xlane.f32.xlu0 %v74
    %v76 = vpop.xlane.xlu0 %75
    %v77 = vadd.f32 %v55, 0.0
    %v78 = vadd.f32 %v58, 0.0
    %v79 = vadd.f32 %v61, 0.0
    %v80 = vadd.f32 %v64, 0.0
    %v81 = vadd.f32 %v67, 0.0
    %v82 = vadd.f32 %v70, 0.0
    %v83 = vadd.f32 %v73, 0.0
    %v84 = vadd.f32 %v76, 0.0
    %v85 = vmul.f32 %v77, 0.00390625
    %v86 = vmul.f32 %v78, 0.00390625
    %v87 = vmul.f32 %v79, 0.00390625
    %v88 = vmul.f32 %v80, 0.00390625
    %v89 = vmul.f32 %v81, 0.00390625
    %v90 = vmul.f32 %v82, 0.00390625
    %v91 = vmul.f32 %v83, 0.00390625
    %v92 = vmul.f32 %v84, 0.00390625
    %v93 = vld [vmem:[%s1] sm:$0xff]
    %v94 = vld [vmem:[%s1 + $0x8] sm:$0xff]
    %v95 = vld [vmem:[%s1 + $0x10] sm:$0xff]
    %v96 = vld [vmem:[%s1 + $0x18] sm:$0xff]
    %v97 = vld [vmem:[%s2] sm:$0x1]
    %v99 = vperm.slane %v97, 0
    %v109 = vlaneseq
    %v110 = vand.u32 %v109, 127
    %v111 = vperm.slane %v85, %v110
    %v112 = vadd.s32 %v110, 4294967288
    %v113 = vperm.slane %v86, %v112
    %vm114 = vcmask 130112
    %v115 = vsel %vm114, %v113, %v111
    %v116 = vadd.s32 %v110, 4294967280
    %v117 = vperm.slane %v87, %v116
    %vm118 = vcmask 195712
    %v119 = vsel %vm118, %v117, %v115
    %v120 = vadd.s32 %v110, 4294967272
    %v121 = vperm.slane %v88, %v120
    %vm122 = vcmask 261312
    %v123 = vsel %vm122, %v121, %v119
    %v124 = vperm.slane %v89, %v110
    %v125 = vperm.slane %v90, %v112
    %v126 = vsel %vm114, %v125, %v124
    %v127 = vperm.slane %v91, %v116
    %v128 = vsel %vm118, %v127, %v126
    %v129 = vperm.slane %v92, %v120
    %v130 = vsel %vm122, %v129, %v128
    %vm131 = vcmask 1041409
    %v132 = vsel %vm131, %v130, %v123
    %vm133 = vcmask 261120
    %v134 = vsel %vm133, %v132, 0
    %136 = vmatpush.msra.mxu0 0.0
    %137 = vmatpush.msra.mxu0 0.0
    %138 = vmatpush.msra.mxu0 0.0
    %139 = vmatpush.msra.mxu0 0.0
    %140 = vmatpush.msra.mxu0 0.0
    %141 = vmatpush.msra.mxu0 0.0
    %142 = vmatpush.msra.mxu0 0.0
    %143 = vmatpush.msra.mxu0 0.0
    %144 = vmatpush.msra.mxu0 0.0
    %145 = vmatpush.msra.mxu0 0.0
    %146 = vmatpush.msra.mxu0 0.0
    %147 = vmatpush.msra.mxu0 0.0
    %148 = vmatpush.msra.mxu0 %v96
    %149 = vmatpush.msra.mxu0 %v95
    %150 = vmatpush.msra.mxu0 %v94
    %151 = vmatpush.msra.mxu0 %v93
    %152 = vmatmul.f32.gmra.mxu0 %v134
    %v153 = vpop.f32.mrf.mxu0
    %v154 = vadd.f32 %v99, %v153
    %155 = vdwg.mxu0
    %v156 = vmax.f32 %v154, 0.0
    %v157 = vld [vmem:[%s3] sm:$0x3]
    %v158 = vld [vmem:[%s4] sm:$0x1]
    %v160 = vperm.slane %v158, 0
    %vm162 = vcmask 15360
    %v164 = vsel %vm162, %v156, 0
    %vm166 = vcmask 1041408
    %v168 = vsel %vm166, %v157, 0
    %170 = vmatpush.msra.mxu0 0.0
    %171 = vmatpush.msra.mxu0 0.0
    %172 = vmatpush.msra.mxu0 0.0
    %173 = vmatpush.msra.mxu0 0.0
    %174 = vmatpush.msra.mxu0 0.0
    %175 = vmatpush.msra.mxu0 0.0
    %176 = vmatpush.msra.mxu0 0.0
    %177 = vmatpush.msra.mxu0 0.0
    %178 = vmatpush.msra.mxu0 0.0
    %179 = vmatpush.msra.mxu0 0.0
    %180 = vmatpush.msra.mxu0 0.0
    %181 = vmatpush.msra.mxu0 0.0
    %182 = vmatpush.msra.mxu0 0.0
    %183 = vmatpush.msra.mxu0 0.0
    %184 = vmatpush.msra.mxu0 0.0
    %185 = vmatpush.msra.mxu0 %v168
    %186 = vmatmul.f32.gmra.mxu0 %v164
    %v187 = vpop.f32.mrf.mxu0
    %v188 = vadd.f32 %v160, %v187
    %189 = vdwg.mxu0
    %v190 = vxor.u32 %v188, 2147483648
    %v191 = vmul.f32 %v190, 1.442695
    %v192 = vpow.pop %v191
    %v193 = vadd.f32 %v192, 1.0
    %v194 = vrcp.pop %v193
    %v195 = vmul.f32 %v193, %v194
    %v196 = vsub.f32 1.0, %v195
    %v197 = vmul.f32 %v194, %v196
    %v198 = vadd.f32 %v194, %v197
    %vm199 = vweird.f32 %v193
    %vm200 = vweird.f32 %v194
    %vm201 = vmor %vm199, %vm200
    %v202 = vsel %vm201, %v194, %v198
    %v203 = vand.u32 2147483647, %v193
    %vm204 = vcmp.eq.f32.partialorder %v203, 8.507059e+37
    %v205 = vand.u32 %v193, 2147483648
    %v206 = vor.u32 1.1754944e-38, %v205
    %v207 = vsel %vm204, %v206, %v202
    %v208 = vmul.f32 1.0, %v207
    %v209 = vperm.slane %v208, 0
    %v210 = vlaneseq
    %v211 = vshrl.u32 %v210, 7
    %213 = vset.pattern.permute.xlu0 %v211
    %214 = vperm.xlu0 %213, %v209
    %v215 = vpop.permute.xlu0 %214
    %v216 = vlaneseq
    %v217 = vshrl.u32 %v216, 7
    %v218 = vadd.s32 %v217, 8
    %219 = vset.pattern.permute.xlu0 %v218
    %220 = vperm.xlu0 %219, %v209
    %v221 = vpop.permute.xlu0 %220
    %v222 = vlaneseq
    %v223 = vshrl.u32 %v222, 7
    %v224 = vadd.s32 %v223, 16
    %225 = vset.pattern.permute.xlu0 %v224
    %226 = vperm.xlu0 %225, %v209
    %v227 = vpop.permute.xlu0 %226
    %v228 = vlaneseq
    %v229 = vshrl.u32 %v228, 7
    %v230 = vadd.s32 %v229, 24
    %231 = vset.pattern.permute.xlu0 %v230
    %232 = vperm.xlu0 %231, %v209
    %v233 = vpop.permute.xlu0 %232
    %v234 = vperm.slane %v208, 1
    %v235 = vlaneseq
    %v236 = vshrl.u32 %v235, 7
    %238 = vset.pattern.permute.xlu0 %v236
    %239 = vperm.xlu0 %238, %v234
    %v240 = vpop.permute.xlu0 %239
    %v241 = vlaneseq
    %v242 = vshrl.u32 %v241, 7
    %v243 = vadd.s32 %v242, 8
    %244 = vset.pattern.permute.xlu0 %v243
    %245 = vperm.xlu0 %244, %v234
    %v246 = vpop.permute.xlu0 %245
    %v247 = vlaneseq
    %v248 = vshrl.u32 %v247, 7
    %v249 = vadd.s32 %v248, 16
    %250 = vset.pattern.permute.xlu0 %v249
    %251 = vperm.xlu0 %250, %v234
    %v252 = vpop.permute.xlu0 %251
    %v253 = vlaneseq
    %v254 = vshrl.u32 %v253, 7
    %v255 = vadd.s32 %v254, 24
    %256 = vset.pattern.permute.xlu0 %v255
    %257 = vperm.xlu0 %256, %v234
    %v258 = vpop.permute.xlu0 %257
    %v259 = vmul.f32 %v37, %v215
    %v260 = vmul.f32 %v38, %v215
    %v261 = vmul.f32 %v39, %v221
    %v262 = vmul.f32 %v40, %v221
    %v263 = vmul.f32 %v41, %v227
    %v264 = vmul.f32 %v42, %v227
    %v265 = vmul.f32 %v43, %v233
    %v266 = vmul.f32 %v44, %v233
    %v267 = vmul.f32 %v45, %v240
    %v268 = vmul.f32 %v46, %v240
    %v269 = vmul.f32 %v47, %v246
    %v270 = vmul.f32 %v48, %v246
    %v271 = vmul.f32 %v49, %v252
    %v272 = vmul.f32 %v50, %v252
    %v273 = vmul.f32 %v51, %v258
    %v274 = vmul.f32 %v52, %v258
    %275 = vst [vmem:[#allocation5] sm:$0xff] %v259
    %276 = vst [vmem:[#allocation5 + $0x8] sm:$0xff] %v260
    %277 = vst [vmem:[#allocation5 + $0x10] sm:$0xff] %v261
    %278 = vst [vmem:[#allocation5 + $0x18] sm:$0xff] %v262
    %279 = vst [vmem:[#allocation5 + $0x20] sm:$0xff] %v263
    %280 = vst [vmem:[#allocation5 + $0x28] sm:$0xff] %v264
    %281 = vst [vmem:[#allocation5 + $0x30] sm:$0xff] %v265
    %282 = vst [vmem:[#allocation5 + $0x38] sm:$0xff] %v266
    %283 = vst [vmem:[#allocation5 + $0x40] sm:$0xff] %v267
    %284 = vst [vmem:[#allocation5 + $0x48] sm:$0xff] %v268
    %285 = vst [vmem:[#allocation5 + $0x50] sm:$0xff] %v269
    %286 = vst [vmem:[#allocation5 + $0x58] sm:$0xff] %v270
    %287 = vst [vmem:[#allocation5 + $0x60] sm:$0xff] %v271
    %288 = vst [vmem:[#allocation5 + $0x68] sm:$0xff] %v272
    %289 = vst [vmem:[#allocation5 + $0x70] sm:$0xff] %v273
    %290 = vst [vmem:[#allocation5 + $0x78] sm:$0xff] %v274
    // Predicated region
    $region26: #{tpu_custom_call.1} parent=1 // pred_check
      _
    $region27: #{tpu_custom_call.1} parent=1 // pred_check_branch
      %292 = sbr.rel (0) target = $region29
    $region28: #{tpu_custom_call.1} parent=1 // pred_region
      %294 = vsyncadd [#allocation4], 0
      %s295 = sshll.u32 [#allocation5], 4
      %s296 = int_to_ptr.vmem [resolvable:$true] %s295
      %s297 = sshll.u32 %s5, 4
      %s298 = int_to_ptr.hbm [resolvable:$true] %s297
      %303 = dma.vmem_to_hbm [thread:$0]  %s296, 2048, %s298, [#allocation4], 256, 256, 16
    $region29: #{tpu_custom_call.1} parent=1 // pred_fallthru
      _
    // Predicated region
    $region30: #{tpu_custom_call.1} parent=1 // pred_check
      _
    $region31: #{tpu_custom_call.1} parent=1 // pred_check_branch
      %305 = sbr.rel (0) target = $region33
    $region32: #{tpu_custom_call.1} parent=1 // pred_region
      %307 = dma.done [#allocation4], 2048
    $region33: #{tpu_custom_call.1} parent=1 // pred_fallthru
      _
    %308 = vsyncpa [#allocation3], 1
    %309 = vsyncpa [#allocation4], 1

</llo_original>
